<compile_context>
chip_gen: v7x
topology: tpu7x:2x2x1
jax: 0.10.0
libtpu: 0.0.40
codegen_flags: <defaults>
</compile_context>

<pallas_src>
import functools

import numpy as np
import jax
import jax.numpy as jnp
from jax import lax
from jax.experimental import pallas as pl
from jax.experimental.pallas import tpu as pltpu


# ------------- Kernel 1: conv3x3 (roll-based im2col) + BN partial statistics ------------- #
def conv3x3_stats_kernel(x_ref, w_ref, mask_ref, y_ref, stat_ref, col_ref, *, img_w):
    # x_ref   : (Cin, Nb*H*W)    bf16  input, batch elements concatenated along lanes
    # w_ref   : (Cout, 9*Cin)    bf16  weights, K ordered tap-major / Cin-minor
    # mask_ref: (9, 1, Nb*H*W)   f32   0/1 validity mask per tap (zero padding + wrap kill)
    # y_ref   : (Cout, Nb*H*W)   bf16  conv output (lane-dense)
    # stat_ref: (1, Cout, 2)     f32   merged [sum, sum_of_squares] per channel, this block
    # col_ref : (9*Cin, Nb*H*W)  f32   im2col scratch (f32 keeps every tap store
    #                                  (8,128)-tile aligned for Cin % 8 == 0; a single pack
    #                                  to bf16 afterwards feeds the MXU)
    cin = x_ref.shape[0]
    lanes = x_ref.shape[1]

    x = x_ref[...].astype(jnp.float32)                        # (Cin, L); exact upcast

    t = 0
    for oy in (-1, 0, 1):
        for ox in (-1, 0, 1):
            off = oy * img_w + ox                             # flat-image read offset
            # Want T[k] = x[k + off] at valid positions -> roll by -off; the wraparound
            # (and the zero padding of the 3x3 conv) is killed by the precomputed mask.
            shifted = x if off == 0 else pltpu.roll(x, (-off) % lanes, 1)
            col_ref[pl.ds(t * cin, cin), :] = shifted * mask_ref[t]
            t += 1

    col = col_ref[...].astype(jnp.bfloat16)                   # one pack -> one MXU matmul
    y = jnp.dot(w_ref[...], col, preferred_element_type=jnp.float32)   # (Cout, Nb*H*W)

    y_ref[...] = y.astype(jnp.bfloat16)
    s = jnp.sum(y, axis=1, keepdims=True)                     # f32 partial sums for BN
    q = jnp.sum(y * y, axis=1, keepdims=True)
    stat_ref[0] = jnp.concatenate([s, q], axis=1)             # single merged (Cout, 2) store


# ------------------ Kernel 2: affine BN + ReLU + SoftPool 2x2 / stride 2 ------------------ #
def bn_relu_softpool_kernel(y_ref, sb_ref, pool_ref, o_ref):
    # y_ref   : (Cout, Nb*H*W)        bf16  conv output block
    # sb_ref  : (Cout, 2)             f32   [:, 0] = gamma/sqrt(var+eps), [:, 1] = folded bias
    # pool_ref: (Nb*H*W, Nb*Hp*Wp)    bf16  block-diagonal 0/1 window-sum matrix
    # o_ref   : (1, Cout, Nb*Hp*Wp)   f32
    c = y_ref.shape[0]
    sb = sb_ref[...]

    y = y_ref[...].astype(jnp.float32) * sb[:, 0:1] + sb[:, 1:2]   # BN (folded batch stats)
    y = jnp.maximum(y, 0.0)                                        # ReLU
    e = jnp.exp(y)                                                 # y >= 0 -> e >= 1 -> den >= 4
                                                                   # (no max-shift, no NaN path)
    # avg(e*y)/avg(e) == sum(e*y)/sum(e): both pools in ONE bf16 matmul on concat([e, e*y]).
    stacked = jnp.concatenate([e, e * y], axis=0).astype(jnp.bfloat16)   # (2C, L)
    pooled = jnp.dot(stacked, pool_ref[...], preferred_element_type=jnp.float32)
    den = pooled[:c]
    num = pooled[c:]
    o_ref[0] = num * pl.reciprocal(den, approx=True)               # EUP reciprocal (den >= 4)


# ---------------------------------------- Wrapper ---------------------------------------- #
def _tap_masks(H, W, nb):
    """(9, 1, nb*H*W) 0/1 masks zeroing taps that fall outside each (padded) image."""
    HW = H * W
    p = np.arange(nb * HW) % HW
    i, j = p // W, p % W
    rows = []
    for oy in (-1, 0, 1):
        for ox in (-1, 0, 1):
            ok = (i + oy >= 0) & (i + oy < H) & (j + ox >= 0) & (j + ox < W)
            rows.append(ok.astype(np.float32))
    return jnp.asarray(np.stack(rows, axis=0)[:, None, :])


def _pool_matrix(H, W, nb):
    """Block-diagonal 0/1 matrix summing each 2x2/stride-2 window, per batch element."""
    Hp, Wp = H // 2, W // 2
    P = np.zeros((H * W, Hp * Wp), np.float32)
    for ii in range(Hp):
        for jj in range(Wp):
            for p in range(2):
                for q in range(2):
                    P[(2 * ii + p) * W + (2 * jj + q), ii * Wp + jj] = 1.0
    Pb = np.kron(np.eye(nb, dtype=np.float32), P)          # (nb*H*W, nb*Hp*Wp)
    return jnp.asarray(Pb, dtype=jnp.bfloat16)             # 0/1 entries exact in bf16


def block_forward(x_nchw, w_oihw, gamma, beta, eps=1e-5, block_n=None):
    N, Cin, H, W = x_nchw.shape
    Cout = w_oihw.shape[0]
    Hp, Wp = H // 2, W // 2
    HW, HpWp = H * W, Hp * Wp

    # Batch blocking: widen each grid step's matmuls, but keep >= 2 grid steps when possible
    # so the "parallel" batch axis can still shard across v7x's two TensorCores.
    if block_n is None:
        block_n = 1
        for cand in (8, 4, 2):
            if N % cand == 0 and N // cand >= 2:
                block_n = cand
                break
    assert N % block_n == 0
    G = N // block_n
    L, Lp = block_n * HW, block_n * HpWp

    # Lane-major layout: batch folded into the lane-dense spatial axis; x in bf16 (half DMA).
    x_flat = jnp.transpose(x_nchw, (1, 0, 2, 3)).reshape(Cin, N * HW).astype(jnp.bfloat16)
    # (Cout, Cin, 3, 3) -> (Cout, 9*Cin), K ordered tap-major / Cin-minor to match im2col.
    wk = jnp.transpose(w_oihw.astype(jnp.float32).reshape(Cout, Cin, 9), (0, 2, 1))
    wk = wk.reshape(Cout, 9 * Cin).astype(jnp.bfloat16)
    masks = _tap_masks(H, W, block_n)

    cparams = pltpu.CompilerParams(
        dimension_semantics=("parallel",),
        vmem_limit_bytes=32 * 1024 * 1024,   # explicit (v5e default scoped limit is 16 MiB)
    )

    y_flat, stats = pl.pallas_call(
        functools.partial(conv3x3_stats_kernel, img_w=W),
        out_shape=(
            jax.ShapeDtypeStruct((Cout, N * HW), jnp.bfloat16),
            jax.ShapeDtypeStruct((G, Cout, 2), jnp.float32),
        ),
        grid=(G,),
        in_specs=[
            pl.BlockSpec((Cin, L), lambda g: (0, g)),
            pl.BlockSpec((Cout, 9 * Cin), lambda g: (0, 0)),
            pl.BlockSpec((9, 1, L), lambda g: (0, 0, 0)),
        ],
        out_specs=(
            pl.BlockSpec((Cout, L), lambda g: (0, g)),
            pl.BlockSpec((1, Cout, 2), lambda g: (g, 0, 0)),
        ),
        scratch_shapes=[pltpu.VMEM((9 * Cin, L), jnp.float32)],
        compiler_params=cparams,
    )(x_flat, wk, masks)

    # BatchNorm2d default (training) forward: batch statistics over (N, H, W), biased var,
    # folded into a per-channel affine from the per-block partial sums (no HBM re-read of y).
    cnt = jnp.float32(N * H * W)
    mean = jnp.sum(stats[:, :, 0], axis=0) / cnt
    var = jnp.sum(stats[:, :, 1], axis=0) / cnt - mean * mean
    scale = gamma.astype(jnp.float32) * lax.rsqrt(var + eps)
    bias = beta.astype(jnp.float32) - mean * scale
    sb = jnp.stack([scale, bias], axis=1)                      # (Cout, 2) merged scale/bias

    pool = _pool_matrix(H, W, block_n)

    out_flat = pl.pallas_call(
        bn_relu_softpool_kernel,
        out_shape=jax.ShapeDtypeStruct((G, Cout, Lp), jnp.float32),
        grid=(G,),
        in_specs=[
            pl.BlockSpec((Cout, L), lambda g: (0, g)),
            pl.BlockSpec((Cout, 2), lambda g: (0, 0)),
            pl.BlockSpec((L, Lp), lambda g: (0, 0)),
        ],
        out_specs=pl.BlockSpec((1, Cout, Lp), lambda g: (g, 0, 0)),
        compiler_params=cparams,
    )(y_flat, sb, pool)

    # (G, Cout, Nb*Hp*Wp) -> (N, Cout, Hp, Wp): wrapper-side layout plumbing only.
    out = out_flat.reshape(G, Cout, block_n, Hp, Wp)
    return jnp.transpose(out, (0, 2, 1, 3, 4)).reshape(N, Cout, Hp, Wp)


# ------------------------------ Pure-JAX reference (NCHW) -------------------------------- #
def block_reference(x_nchw, w_oihw, gamma, beta, eps=1e-5):
    y = lax.conv_general_dilated(
        x_nchw, w_oihw, window_strides=(1, 1), padding=((1, 1), (1, 1)),
        dimension_numbers=("NCHW", "OIHW", "NCHW"), precision=lax.Precision.HIGHEST)
    mean = jnp.mean(y, axis=(0, 2, 3), keepdims=True)
    var = jnp.var(y, axis=(0, 2, 3), keepdims=True)
    yb = (y - mean) * lax.rsqrt(var + eps) * gamma.reshape(1, -1, 1, 1) + beta.reshape(1, -1, 1, 1)
    yr = jnp.maximum(yb, 0.0)
    e = jnp.exp(yr)

    def avgpool(t):
        n, c, h, w = t.shape
        return t.reshape(n, c, h // 2, 2, w // 2, 2).mean(axis=(3, 5))

    return avgpool(e * yr) / avgpool(e)


if __name__ == "__main__":
    N, Cin, Cout, H, W = 2, 8, 16, 16, 16
    key = jax.random.PRNGKey(0)
    k1, k2, k3, k4 = jax.random.split(key, 4)

    x = jax.random.normal(k1, (N, Cin, H, W), jnp.float32)            # PyTorch NCHW input
    w = 0.1 * jax.random.normal(k2, (Cout, Cin, 3, 3), jnp.float32)   # Conv2d weight (no bias)
    gamma = 1.0 + 0.1 * jax.random.normal(k3, (Cout,), jnp.float32)   # BN weight
    beta = 0.1 * jax.random.normal(k4, (Cout,), jnp.float32)          # BN bias

    out = jax.block_until_ready(block_forward(x, w, gamma, beta))
    assert out.shape == (N, Cout, H // 2, W // 2), out.shape

    ref = block_reference(x, w, gamma, beta)
    if not bool(jnp.allclose(out, ref, rtol=2e-2, atol=2e-2)):
        raise SystemExit(
            "mismatch: max abs diff = %g" % float(jnp.max(jnp.abs(out - ref))))

    print("KERNEL_OK")
</pallas_src>

<mosaic_0001>
module attributes {stable_mosaic.version = 11 : i64} {
  func.func @conv3x3_stats_kernel(%arg0: i32, %arg1: memref<8x256xbf16, #tpu.memory_space<vmem>>, %arg2: memref<16x72xbf16, #tpu.memory_space<vmem>>, %arg3: memref<9x1x256xf32, #tpu.memory_space<vmem>>, %arg4: memref<16x256xbf16, #tpu.memory_space<vmem>>, %arg5: memref<1x16x2xf32, #tpu.memory_space<vmem>>, %arg6: memref<72x256xf32, #tpu.memory_space<vmem>>) attributes {dimension_semantics = [#tpu.dimension_semantics<parallel>], iteration_bounds = array<i64: 2>, scalar_prefetch = 0 : i64, scratch_operands = 1 : i64, tpu.core_type = #tpu.core_type<tc>, window_params = [{transform_indices = @transform_0, window_bounds = array<i64: 8, 256>}, {pipeline_mode = #tpu.pipeline_mode<synchronous>, transform_indices = @transform_1, window_bounds = array<i64: 16, 72>}, {pipeline_mode = #tpu.pipeline_mode<synchronous>, transform_indices = @transform_2, window_bounds = array<i64: 9, 1, 256>}, {transform_indices = @transform_3, window_bounds = array<i64: 16, 256>}, {transform_indices = @transform_4, window_bounds = array<i64: 1, 16, 2>}]} {
    %c0 = arith.constant 0 : index
    %c0_0 = arith.constant 0 : index
    %0 = vector.load %arg1[%c0, %c0_0] : memref<8x256xbf16, #tpu.memory_space<vmem>>, vector<8x256xbf16>
    %1 = arith.extf %0 : vector<8x256xbf16> to vector<8x256xf32>
    %c17_i32 = arith.constant 17 : i32
    %2 = tpu.dynamic_rotate %1 by %c17_i32 dim 1 : vector<8x256xf32>, i32 -> vector<8x256xf32>
    %c0_1 = arith.constant 0 : index
    %c0_2 = arith.constant 0 : index
    %c0_3 = arith.constant 0 : index
    %3 = vector.load %arg3[%c0_1, %c0_2, %c0_3] : memref<9x1x256xf32, #tpu.memory_space<vmem>>, vector<1x1x256xf32>
    %4 = vector.shape_cast %3 : vector<1x1x256xf32> to vector<1x256xf32>
    %5 = vector.broadcast %4 : vector<1x256xf32> to vector<8x256xf32>
    %6 = arith.mulf %2, %5 : vector<8x256xf32>
    %c0_4 = arith.constant 0 : index
    %c0_5 = arith.constant 0 : index
    %7 = vector.load %arg6[%c0_4, %c0_5] : memref<72x256xf32, #tpu.memory_space<vmem>>, vector<8x256xf32>
    tpu.vector_store %arg6[%c0_4, %c0_5], %6 {strides = array<i32>} : memref<72x256xf32, #tpu.memory_space<vmem>>, vector<8x256xf32>,
    %c16_i32 = arith.constant 16 : i32
    %8 = tpu.dynamic_rotate %1 by %c16_i32 dim 1 : vector<8x256xf32>, i32 -> vector<8x256xf32>
    %c1 = arith.constant 1 : index
    %c0_6 = arith.constant 0 : index
    %c0_7 = arith.constant 0 : index
    %9 = vector.load %arg3[%c1, %c0_6, %c0_7] : memref<9x1x256xf32, #tpu.memory_space<vmem>>, vector<1x1x256xf32>
    %10 = vector.shape_cast %9 : vector<1x1x256xf32> to vector<1x256xf32>
    %11 = vector.broadcast %10 : vector<1x256xf32> to vector<8x256xf32>
    %12 = arith.mulf %8, %11 : vector<8x256xf32>
    %c8 = arith.constant 8 : index
    %c0_8 = arith.constant 0 : index
    %13 = vector.load %arg6[%c8, %c0_8] : memref<72x256xf32, #tpu.memory_space<vmem>>, vector<8x256xf32>
    tpu.vector_store %arg6[%c8, %c0_8], %12 {strides = array<i32>} : memref<72x256xf32, #tpu.memory_space<vmem>>, vector<8x256xf32>,
    %c15_i32 = arith.constant 15 : i32
    %14 = tpu.dynamic_rotate %1 by %c15_i32 dim 1 : vector<8x256xf32>, i32 -> vector<8x256xf32>
    %c2 = arith.constant 2 : index
    %c0_9 = arith.constant 0 : index
    %c0_10 = arith.constant 0 : index
    %15 = vector.load %arg3[%c2, %c0_9, %c0_10] : memref<9x1x256xf32, #tpu.memory_space<vmem>>, vector<1x1x256xf32>
    %16 = vector.shape_cast %15 : vector<1x1x256xf32> to vector<1x256xf32>
    %17 = vector.broadcast %16 : vector<1x256xf32> to vector<8x256xf32>
    %18 = arith.mulf %14, %17 : vector<8x256xf32>
    %c16 = arith.constant 16 : index
    %c0_11 = arith.constant 0 : index
    %19 = vector.load %arg6[%c16, %c0_11] : memref<72x256xf32, #tpu.memory_space<vmem>>, vector<8x256xf32>
    tpu.vector_store %arg6[%c16, %c0_11], %18 {strides = array<i32>} : memref<72x256xf32, #tpu.memory_space<vmem>>, vector<8x256xf32>,
    %c1_i32 = arith.constant 1 : i32
    %20 = tpu.dynamic_rotate %1 by %c1_i32 dim 1 : vector<8x256xf32>, i32 -> vector<8x256xf32>
    %c3 = arith.constant 3 : index
    %c0_12 = arith.constant 0 : index
    %c0_13 = arith.constant 0 : index
    %21 = vector.load %arg3[%c3, %c0_12, %c0_13] : memref<9x1x256xf32, #tpu.memory_space<vmem>>, vector<1x1x256xf32>
    %22 = vector.shape_cast %21 : vector<1x1x256xf32> to vector<1x256xf32>
    %23 = vector.broadcast %22 : vector<1x256xf32> to vector<8x256xf32>
    %24 = arith.mulf %20, %23 : vector<8x256xf32>
    %c24 = arith.constant 24 : index
    %c0_14 = arith.constant 0 : index
    %25 = vector.load %arg6[%c24, %c0_14] : memref<72x256xf32, #tpu.memory_space<vmem>>, vector<8x256xf32>
    tpu.vector_store %arg6[%c24, %c0_14], %24 {strides = array<i32>} : memref<72x256xf32, #tpu.memory_space<vmem>>, vector<8x256xf32>,
    %c4 = arith.constant 4 : index
    %c0_15 = arith.constant 0 : index
    %c0_16 = arith.constant 0 : index
    %26 = vector.load %arg3[%c4, %c0_15, %c0_16] : memref<9x1x256xf32, #tpu.memory_space<vmem>>, vector<1x1x256xf32>
    %27 = vector.shape_cast %26 : vector<1x1x256xf32> to vector<1x256xf32>
    %28 = vector.broadcast %27 : vector<1x256xf32> to vector<8x256xf32>
    %29 = arith.mulf %1, %28 : vector<8x256xf32>
    %c32 = arith.constant 32 : index
    %c0_17 = arith.constant 0 : index
    %30 = vector.load %arg6[%c32, %c0_17] : memref<72x256xf32, #tpu.memory_space<vmem>>, vector<8x256xf32>
    tpu.vector_store %arg6[%c32, %c0_17], %29 {strides = array<i32>} : memref<72x256xf32, #tpu.memory_space<vmem>>, vector<8x256xf32>,
    %c255_i32 = arith.constant 255 : i32
    %31 = tpu.dynamic_rotate %1 by %c255_i32 dim 1 : vector<8x256xf32>, i32 -> vector<8x256xf32>
    %c5 = arith.constant 5 : index
    %c0_18 = arith.constant 0 : index
    %c0_19 = arith.constant 0 : index
    %32 = vector.load %arg3[%c5, %c0_18, %c0_19] : memref<9x1x256xf32, #tpu.memory_space<vmem>>, vector<1x1x256xf32>
    %33 = vector.shape_cast %32 : vector<1x1x256xf32> to vector<1x256xf32>
    %34 = vector.broadcast %33 : vector<1x256xf32> to vector<8x256xf32>
    %35 = arith.mulf %31, %34 : vector<8x256xf32>
    %c40 = arith.constant 40 : index
    %c0_20 = arith.constant 0 : index
    %36 = vector.load %arg6[%c40, %c0_20] : memref<72x256xf32, #tpu.memory_space<vmem>>, vector<8x256xf32>
    tpu.vector_store %arg6[%c40, %c0_20], %35 {strides = array<i32>} : memref<72x256xf32, #tpu.memory_space<vmem>>, vector<8x256xf32>,
    %c241_i32 = arith.constant 241 : i32
    %37 = tpu.dynamic_rotate %1 by %c241_i32 dim 1 : vector<8x256xf32>, i32 -> vector<8x256xf32>
    %c6 = arith.constant 6 : index
    %c0_21 = arith.constant 0 : index
    %c0_22 = arith.constant 0 : index
    %38 = vector.load %arg3[%c6, %c0_21, %c0_22] : memref<9x1x256xf32, #tpu.memory_space<vmem>>, vector<1x1x256xf32>
    %39 = vector.shape_cast %38 : vector<1x1x256xf32> to vector<1x256xf32>
    %40 = vector.broadcast %39 : vector<1x256xf32> to vector<8x256xf32>
    %41 = arith.mulf %37, %40 : vector<8x256xf32>
    %c48 = arith.constant 48 : index
    %c0_23 = arith.constant 0 : index
    %42 = vector.load %arg6[%c48, %c0_23] : memref<72x256xf32, #tpu.memory_space<vmem>>, vector<8x256xf32>
    tpu.vector_store %arg6[%c48, %c0_23], %41 {strides = array<i32>} : memref<72x256xf32, #tpu.memory_space<vmem>>, vector<8x256xf32>,
    %c240_i32 = arith.constant 240 : i32
    %43 = tpu.dynamic_rotate %1 by %c240_i32 dim 1 : vector<8x256xf32>, i32 -> vector<8x256xf32>
    %c7 = arith.constant 7 : index
    %c0_24 = arith.constant 0 : index
    %c0_25 = arith.constant 0 : index
    %44 = vector.load %arg3[%c7, %c0_24, %c0_25] : memref<9x1x256xf32, #tpu.memory_space<vmem>>, vector<1x1x256xf32>
    %45 = vector.shape_cast %44 : vector<1x1x256xf32> to vector<1x256xf32>
    %46 = vector.broadcast %45 : vector<1x256xf32> to vector<8x256xf32>
    %47 = arith.mulf %43, %46 : vector<8x256xf32>
    %c56 = arith.constant 56 : index
    %c0_26 = arith.constant 0 : index
    %48 = vector.load %arg6[%c56, %c0_26] : memref<72x256xf32, #tpu.memory_space<vmem>>, vector<8x256xf32>
    tpu.vector_store %arg6[%c56, %c0_26], %47 {strides = array<i32>} : memref<72x256xf32, #tpu.memory_space<vmem>>, vector<8x256xf32>,
    %c239_i32 = arith.constant 239 : i32
    %49 = tpu.dynamic_rotate %1 by %c239_i32 dim 1 : vector<8x256xf32>, i32 -> vector<8x256xf32>
    %c8_27 = arith.constant 8 : index
    %c0_28 = arith.constant 0 : index
    %c0_29 = arith.constant 0 : index
    %50 = vector.load %arg3[%c8_27, %c0_28, %c0_29] : memref<9x1x256xf32, #tpu.memory_space<vmem>>, vector<1x1x256xf32>
    %51 = vector.shape_cast %50 : vector<1x1x256xf32> to vector<1x256xf32>
    %52 = vector.broadcast %51 : vector<1x256xf32> to vector<8x256xf32>
    %53 = arith.mulf %49, %52 : vector<8x256xf32>
    %c64 = arith.constant 64 : index
    %c0_30 = arith.constant 0 : index
    %54 = vector.load %arg6[%c64, %c0_30] : memref<72x256xf32, #tpu.memory_space<vmem>>, vector<8x256xf32>
    tpu.vector_store %arg6[%c64, %c0_30], %53 {strides = array<i32>} : memref<72x256xf32, #tpu.memory_space<vmem>>, vector<8x256xf32>,
    %c0_31 = arith.constant 0 : index
    %c0_32 = arith.constant 0 : index
    %55 = vector.load %arg6[%c0_31, %c0_32] : memref<72x256xf32, #tpu.memory_space<vmem>>, vector<72x256xf32>
    %56 = arith.truncf %55 : vector<72x256xf32> to vector<72x256xbf16>
    %c0_33 = arith.constant 0 : index
    %c0_34 = arith.constant 0 : index
    %57 = vector.load %arg2[%c0_33, %c0_34] : memref<16x72xbf16, #tpu.memory_space<vmem>>, vector<16x72xbf16>
    %cst = arith.constant dense<0.000000e+00> : vector<16x256xf32>
    %58 = tpu.matmul %57, %56, %cst {dimension_numbers = #tpu.dot_dimension_numbers<[1], [0], [0], [1], [0, 0, 1, 1], [], []>} : vector<16x72xbf16>, vector<72x256xbf16>, vector<16x256xf32> -> vector<16x256xf32>
    %59 = arith.truncf %58 : vector<16x256xf32> to vector<16x256xbf16>
    %c0_35 = arith.constant 0 : index
    %c0_36 = arith.constant 0 : index
    %60 = vector.load %arg4[%c0_35, %c0_36] : memref<16x256xbf16, #tpu.memory_space<vmem>>, vector<16x256xbf16>
    tpu.vector_store %arg4[%c0_35, %c0_36], %59 {strides = array<i32>} : memref<16x256xbf16, #tpu.memory_space<vmem>>, vector<16x256xbf16>,
    %cst_37 = arith.constant dense<0.000000e+00> : vector<16xf32>
    %61 = vector.multi_reduction <add>, %58, %cst_37 [1] : vector<16x256xf32> to vector<16xf32>
    %62 = vector.shape_cast %61 : vector<16xf32> to vector<16x1xf32>
    %63 = arith.mulf %58, %58 : vector<16x256xf32>
    %cst_38 = arith.constant dense<0.000000e+00> : vector<16xf32>
    %64 = vector.multi_reduction <add>, %63, %cst_38 [1] : vector<16x256xf32> to vector<16xf32>
    %65 = vector.shape_cast %64 : vector<16xf32> to vector<16x1xf32>
    %66 = tpu.concatenate %62, %65 in 1 : vector<16x1xf32>, vector<16x1xf32> -> vector<16x2xf32>
    %c0_39 = arith.constant 0 : index
    %c0_40 = arith.constant 0 : index
    %c0_41 = arith.constant 0 : index
    %67 = vector.load %arg5[%c0_39, %c0_40, %c0_41] : memref<1x16x2xf32, #tpu.memory_space<vmem>>, vector<1x16x2xf32>
    %68 = vector.shape_cast %67 : vector<1x16x2xf32> to vector<16x2xf32>
    %69 = vector.shape_cast %66 : vector<16x2xf32> to vector<1x16x2xf32>
    tpu.vector_store %arg5[%c0_39, %c0_40, %c0_41], %69 {strides = array<i32>} : memref<1x16x2xf32, #tpu.memory_space<vmem>>, vector<1x16x2xf32>,
    return
  }
  func.func @transform_0(%arg0: i32) -> (i32, i32) {
    %c0_i32 = arith.constant 0 : i32
    %c0_i32_0 = arith.constant 0 : i32
    return %c0_i32, %arg0 : i32, i32
  }
  func.func @transform_1(%arg0: i32) -> (i32, i32) {
    %c0_i32 = arith.constant 0 : i32
    %c0_i32_0 = arith.constant 0 : i32
    %c0_i32_1 = arith.constant 0 : i32
    return %c0_i32, %c0_i32_0 : i32, i32
  }
  func.func @transform_2(%arg0: i32) -> (i32, i32, i32) {
    %c0_i32 = arith.constant 0 : i32
    %c0_i32_0 = arith.constant 0 : i32
    %c0_i32_1 = arith.constant 0 : i32
    %c0_i32_2 = arith.constant 0 : i32
    return %c0_i32, %c0_i32_0, %c0_i32_1 : i32, i32, i32
  }
  func.func @transform_3(%arg0: i32) -> (i32, i32) {
    %c0_i32 = arith.constant 0 : i32
    %c0_i32_0 = arith.constant 0 : i32
    return %c0_i32, %arg0 : i32, i32
  }
  func.func @transform_4(%arg0: i32) -> (i32, i32, i32) {
    %c0_i32 = arith.constant 0 : i32
    %c0_i32_0 = arith.constant 0 : i32
    %c0_i32_1 = arith.constant 0 : i32
    return %arg0, %c0_i32, %c0_i32_0 : i32, i32, i32
  }
}

</mosaic_0001>

<llo_original>
// kernel: tpu_custom_call.1
$region0: #{tpu_custom_call.1}
  #allocation0 [shape = 'u32[]', space=smem, size = 0x4, offset = 0x4, fixed_abs, tag = 'smem constant byte address 0x4 - core index']
  #allocation1 [shape = 'u32[144,128]{1,0:T(1,128)}', space=vmem, size = 0x12000, scoped, tag = 'internal scratch']
  #allocation2 [shape = 'f32[72,256]{1,0:T(8,128)}', space=vmem, size = 0x12000, scoped, tag = 'scratch operand']
  %s0 = inlined_call_operand.hbm [shape: bf16[8,512], index: 0, kind: input, shape index: {}]
  %s1 = inlined_call_operand.hbm [shape: bf16[16,72], index: 1, kind: input, shape index: {}]
  %s2 = inlined_call_operand.hbm [shape: f32[9,1,256], index: 2, kind: input, shape index: {}]
  %s3 = inlined_call_operand.hbm [shape: bf16[16,512], index: 3, kind: output, shape index: {0}]
  %s4 = inlined_call_operand.vmem [shape: f32[2,16,2], index: 4, kind: output, shape index: {1}]
  %5 = xla_tuple %s3, %s4
  %s6 = sld [smem:[#allocation0]]
  $region65: #{tpu_custom_call.1} parent=0
    _
  %s8 = ssub.s32 1, %s6
  %s9 = scalar_select 0, %s8, %s6
  $region1: #{tpu_custom_call.1} parent=0
    #allocation3 [shape = 'u8[8192]{0}', space=vmem, size = 0x2000, scoped, tag = 'input window, operand 0']
    #allocation4 [shape = 's32[2]{0}', space=sflag, size = 0x8, scoped, tag = 'scoped memory for tpu_custom_call.1']
    #allocation5 [shape = 's32[2]{0}', space=sflag, size = 0x8, scoped, tag = 'scoped memory for tpu_custom_call.1']
    #allocation6 [shape = 'u8[4096]{0}', space=vmem, size = 0x1000, scoped, tag = 'input window, operand 1, single buffered']
    #allocation7 [shape = 's32[1]{0}', space=sflag, size = 0x4, scoped, tag = 'scoped memory for tpu_custom_call.1']
    #allocation8 [shape = 'u8[9216]{0}', space=vmem, size = 0x2400, scoped, tag = 'input window, operand 2, single buffered']
    #allocation9 [shape = 'u8[16384]{0}', space=vmem, size = 0x4000, scoped, tag = 'output window, operand 0']
    %10 = vsyncpa [#allocation4], 0
    %s11 = scalar_lea.sflag [#allocation4], 1
    %12 = vsyncpa %s11, 0
    %13 = vsyncpa [#allocation7], 0
    %14 = vsyncpa [#allocation5], 0
    %s15 = scalar_lea.sflag [#allocation5], 1
    %16 = vsyncpa %s15, 0
    loop: start=0, step=1, limit=4
    $region2: #{tpu_custom_call.1} parent=1 // loop_pre_header
      _
    $region3: #{tpu_custom_call.1} parent=1 // loop_header
      %s18 = sphi 0, %s22
      %p19 = scmp.ge.s32.totalorder %s18, 4
      %s28 = sphi 0, %s30
      %s31 = sphi 0, %s28
      %s32 = sphi 0, %s31
      %s48 = sphi 0, %s32
      %s52 = sphi 0, %s52
      %s54 = sphi 0, %s52
      %s55 = sphi 0, %s54
      %s69 = sphi 0, %s55
      %s73 = sphi 0, %s73
      %s75 = sphi 0, %s73
      %s76 = sphi 0, %s75
      %s90 = sphi 0, %s76
      %s96 = sphi 0, %s98
      %s99 = sphi 0, %s96
      %s100 = sphi 0, %s99
      %s116 = sphi 0, %s100
      %s122 = sphi 0, %s124
      %s125 = sphi 0, %s122
      %s126 = sphi 0, %s125
      %s142 = sphi 0, %s126
    $region4: #{tpu_custom_call.1} parent=1 // loop_header_branch
      %21 = sbr.rel (%p19) target = $region8
    $region5: #{tpu_custom_call.1} parent=1 // loop_body
      %s23 = ssub.s32 %s18, 1
      %s24 = ssub.s32 %s18, 2
      %s25 = sadd.s32 %s18, 1
      %s26 = ssub.s32 %s18, %s25
      %p27 = scmp.eq.s32.totalorder %s26, 0
      %s29 = sadd.s32 %s28, 1
      %s30 = scalar_select %p27, %s28, %s29
      %p33 = pneg %p27
      %p34 = scmp.eq.s32.totalorder %s18, 1
      %p35 = por %p33, %p34
      %p36 = scmp.ne.s32.totalorder %s28, %s31
      %p37 = scmp.eq.s32.totalorder %s18, 0
      %p38 = por %p36, %p37
      %p39 = scmp.ne.s32.totalorder %s28, %s31
      %p40 = scmp.eq.s32.totalorder %s23, 1
      %p41 = por %p39, %p40
      %p42 = scmp.ne.s32.totalorder %s31, %s32
      %p43 = scmp.eq.s32.totalorder %s23, 0
      %p44 = por %p42, %p43
      %p45 = scmp.ne.s32.totalorder %s31, %s32
      %p46 = scmp.eq.s32.totalorder %s24, 1
      %p47 = por %p45, %p46
      %p49 = scmp.ne.s32.totalorder %s32, %s48
      %p50 = scmp.eq.s32.totalorder %s24, 0
      %p51 = por %p49, %p50
      %s53 = sadd.s32 %s52, 1
      %p56 = scmp.eq.s32.totalorder %s18, 1
      %p57 = scmp.ne.s32.totalorder %s52, %s54
      %p58 = scmp.eq.s32.totalorder %s18, 0
      %p59 = por %p57, %p58
      %p60 = scmp.ne.s32.totalorder %s52, %s54
      %p61 = scmp.eq.s32.totalorder %s23, 1
      %p62 = por %p60, %p61
      %p63 = scmp.ne.s32.totalorder %s54, %s55
      %p64 = scmp.eq.s32.totalorder %s23, 0
      %p65 = por %p63, %p64
      %p66 = scmp.ne.s32.totalorder %s54, %s55
      %p67 = scmp.eq.s32.totalorder %s24, 1
      %p68 = por %p66, %p67
      %p70 = scmp.ne.s32.totalorder %s55, %s69
      %p71 = scmp.eq.s32.totalorder %s24, 0
      %p72 = por %p70, %p71
      %s74 = sadd.s32 %s73, 1
      %p77 = scmp.eq.s32.totalorder %s18, 1
      %p78 = scmp.ne.s32.totalorder %s73, %s75
      %p79 = scmp.eq.s32.totalorder %s18, 0
      %p80 = por %p78, %p79
      %p81 = scmp.ne.s32.totalorder %s73, %s75
      %p82 = scmp.eq.s32.totalorder %s23, 1
      %p83 = por %p81, %p82
      %p84 = scmp.ne.s32.totalorder %s75, %s76
      %p85 = scmp.eq.s32.totalorder %s23, 0
      %p86 = por %p84, %p85
      %p87 = scmp.ne.s32.totalorder %s75, %s76
      %p88 = scmp.eq.s32.totalorder %s24, 1
      %p89 = por %p87, %p88
      %p91 = scmp.ne.s32.totalorder %s76, %s90
      %p92 = scmp.eq.s32.totalorder %s24, 0
      %p93 = por %p91, %p92
      %s94 = ssub.s32 %s18, %s25
      %p95 = scmp.eq.s32.totalorder %s94, 0
      %s97 = sadd.s32 %s96, 1
      %s98 = scalar_select %p95, %s96, %s97
      %p101 = pneg %p95
      %p102 = scmp.eq.s32.totalorder %s18, 1
      %p103 = por %p101, %p102
      %p104 = scmp.ne.s32.totalorder %s96, %s99
      %p105 = scmp.eq.s32.totalorder %s18, 0
      %p106 = por %p104, %p105
      %p107 = scmp.ne.s32.totalorder %s96, %s99
      %p108 = scmp.eq.s32.totalorder %s23, 1
      %p109 = por %p107, %p108
      %p110 = scmp.ne.s32.totalorder %s99, %s100
      %p111 = scmp.eq.s32.totalorder %s23, 0
      %p112 = por %p110, %p111
      %p113 = scmp.ne.s32.totalorder %s99, %s100
      %p114 = scmp.eq.s32.totalorder %s24, 1
      %p115 = por %p113, %p114
      %p117 = scmp.ne.s32.totalorder %s100, %s116
      %p118 = scmp.eq.s32.totalorder %s24, 0
      %p119 = por %p117, %p118
      %s120 = ssub.s32 %s18, %s25
      %p121 = scmp.eq.s32.totalorder %s120, 0
      %s123 = sadd.s32 %s122, 1
      %s124 = scalar_select %p121, %s122, %s123
      %p127 = pneg %p121
      %p128 = scmp.eq.s32.totalorder %s18, 1
      %p129 = por %p127, %p128
      %p130 = scmp.ne.s32.totalorder %s122, %s125
      %p131 = scmp.eq.s32.totalorder %s18, 0
      %p132 = por %p130, %p131
      %p133 = scmp.ne.s32.totalorder %s122, %s125
      %p134 = scmp.eq.s32.totalorder %s23, 1
      %p135 = por %p133, %p134
      %p136 = scmp.ne.s32.totalorder %s125, %s126
      %p137 = scmp.eq.s32.totalorder %s23, 0
      %p138 = por %p136, %p137
      %p139 = scmp.ne.s32.totalorder %s125, %s126
      %p140 = scmp.eq.s32.totalorder %s24, 1
      %p141 = por %p139, %p140
      %p143 = scmp.ne.s32.totalorder %s126, %s142
      %p144 = scmp.eq.s32.totalorder %s24, 0
      %p145 = por %p143, %p144
      %p146 = scmp.le.s32.totalorder 1, %s18
      %p147 = scmp.lt.s32.totalorder %s18, 3
      %p148 = pnand %p146, %p147
      %p149 = pneg %p148
      // Predicated region
      $region9: #{tpu_custom_call.1} parent=5 // pred_check
        _
      $region10: #{tpu_custom_call.1} parent=5 // pred_check_branch
        %151 = sbr.rel (%p148) target = $region12
      $region11: #{tpu_custom_call.1} parent=5 // pred_region
        %s152 = ssub.s32 %s18, 1
        // Predicated region
        $region13: #{tpu_custom_call.1} parent=11 // pred_check
          %p153 = pneg %p65
        $region14: #{tpu_custom_call.1} parent=11 // pred_check_branch
          %155 = sbr.rel (%p153) target = $region16
        $region15: #{tpu_custom_call.1} parent=11 // pred_region
          %s157 = ssub.s32 128, 128
          %158 = vsyncadd [#allocation7], %s157
          %s159 = sshll.u32 [#allocation6], 4
          %s160 = int_to_ptr.vmem [resolvable:$true] %s159
          %165 = dma.hbm_to_vmem [thread:$0]  %s1, 128, %s160, [#allocation7], 64, 64, 4
        $region16: #{tpu_custom_call.1} parent=11 // pred_fallthru
          _
        // Predicated region
        $region17: #{tpu_custom_call.1} parent=11 // pred_check
          %p166 = pneg %p86
        $region18: #{tpu_custom_call.1} parent=11 // pred_check_branch
          %168 = sbr.rel (%p166) target = $region20
        $region19: #{tpu_custom_call.1} parent=11 // pred_region
          %s170 = ssub.s32 288, 288
          %171 = vsyncadd [#allocation7], %s170
          %s172 = sshll.u32 [#allocation8], 4
          %s173 = int_to_ptr.vmem [resolvable:$true] %s172
          %178 = dma.hbm_to_vmem [thread:$0]  %s2, 288, %s173, [#allocation7], 32, 32, 2
        $region20: #{tpu_custom_call.1} parent=11 // pred_fallthru
          _
      $region12: #{tpu_custom_call.1} parent=5 // pred_fallthru
        _
      %p179 = scmp.lt.s32.totalorder %s18, 2
      // Predicated region
      $region21: #{tpu_custom_call.1} parent=5 // pred_check
        %p180 = pneg %p179
      $region22: #{tpu_custom_call.1} parent=5 // pred_check_branch
        %182 = sbr.rel (%p180) target = $region24
      $region23: #{tpu_custom_call.1} parent=5 // pred_region
        // Predicated region
        $region25: #{tpu_custom_call.1} parent=23 // pred_check
          %p183 = pneg %p38
        $region26: #{tpu_custom_call.1} parent=23 // pred_check_branch
          %185 = sbr.rel (%p183) target = $region28
        $region27: #{tpu_custom_call.1} parent=23 // pred_region
          %s186 = sand.u32 %s28, 1
          %s187 = scalar_lea.sflag [#allocation4], %s186
          %s188 = sand.u32 %s28, 1
          %s189 = smul.addr %s188, 8
          %s190 = scalar_lea.vmem [#allocation3], %s189
          %s191 = smul.u32 2, %s18
          %s193 = ssub.s32 128, 128
          %194 = vsyncadd %s187, %s193
          %s195 = smul.addr %s191, 64
          %s196 = scalar_lea.hbm %s0, %s195
          %s198 = sshll.u32 %s190, 4
          %s199 = int_to_ptr.vmem [resolvable:$true] %s198
          %201 = dma.hbm_to_vmem [thread:$0]  %s196, 128, %s199, %s187
        $region28: #{tpu_custom_call.1} parent=23 // pred_fallthru
          _
      $region24: #{tpu_custom_call.1} parent=5 // pred_fallthru
        _
      %p202 = scmp.le.s32.totalorder 1, %s18
      %p203 = scmp.lt.s32.totalorder %s18, 3
      %p204 = pnand %p202, %p203
      %p205 = pneg %p204
      // Predicated region
      $region29: #{tpu_custom_call.1} parent=5 // pred_check
        _
      $region30: #{tpu_custom_call.1} parent=5 // pred_check_branch
        %207 = sbr.rel (%p204) target = $region32
      $region31: #{tpu_custom_call.1} parent=5 // pred_region
        %s208 = ssub.s32 %s18, 1
        %s209 = sand.u32 %s31, 1
        %s210 = scalar_lea.sflag [#allocation4], %s209
        %s211 = sand.u32 %s31, 1
        %s212 = smul.addr %s211, 8
        %s213 = scalar_lea.vmem [#allocation3], %s212
        // Predicated region
        $region33: #{tpu_custom_call.1} parent=31 // pred_check
          %p214 = pneg %p44
        $region34: #{tpu_custom_call.1} parent=31 // pred_check_branch
          %216 = sbr.rel (%p214) target = $region36
        $region35: #{tpu_custom_call.1} parent=31 // pred_region
          %217 = dma.done %s210, 128
        $region36: #{tpu_custom_call.1} parent=31 // pred_fallthru
          _
        // Predicated region
        $region37: #{tpu_custom_call.1} parent=31 // pred_check
          %p218 = pneg %p65
        $region38: #{tpu_custom_call.1} parent=31 // pred_check_branch
          %220 = sbr.rel (%p218) target = $region40
        $region39: #{tpu_custom_call.1} parent=31 // pred_region
          %221 = dma.done [#allocation7], 128
        $region40: #{tpu_custom_call.1} parent=31 // pred_fallthru
          _
        // Predicated region
        $region41: #{tpu_custom_call.1} parent=31 // pred_check
          %p222 = pneg %p86
        $region42: #{tpu_custom_call.1} parent=31 // pred_check_branch
          %224 = sbr.rel (%p222) target = $region44
        $region43: #{tpu_custom_call.1} parent=31 // pred_region
          %225 = dma.done [#allocation7], 288
        $region44: #{tpu_custom_call.1} parent=31 // pred_fallthru
          _
        %s226 = sand.u32 %s31, 1
        %s227 = scalar_lea.sflag [#allocation4], %s226
        %s228 = sand.u32 %s31, 1
        %s229 = smul.addr %s228, 8
        %s230 = scalar_lea.vmem [#allocation3], %s229
        %p231 = pneg %p44
        %p232 = pneg %p41
        %p233 = pneg %p65
        %p234 = pneg %p62
        %p235 = pneg %p86
        %p236 = pneg %p83
        %p237 = pneg %p112
        %p238 = pneg %p109
        %s239 = sand.u32 %s99, 1
        %s240 = scalar_lea.sflag [#allocation5], %s239
        %s241 = sand.u32 %s99, 1
        %s242 = smul.addr %s241, 16
        %s243 = scalar_lea.vmem [#allocation9], %s242
        %p244 = pneg %p138
        %p245 = pneg %p135
        %p246 = scmp.lt.s32.totalorder %s23, 1
        %s247 = scalar_select %p246, %s23, 1
        %s248 = smul.addr %s247, 2
        %s249 = smul.addr %s248, 8
        %s250 = scalar_lea.vmem %s4, %s249
        %s251 = smul.u32 2, %s23
        %s252 = smul.u32 2, %s23
        %p253 = scmp.lt.s32.totalorder %s23, 1
        %s254 = scalar_select %p253, %s23, 1
        %s255 = smul.addr %s254, 2
        %s256 = smul.addr %s255, 8
        %s257 = scalar_lea.vmem %s4, %s256
        %v259 = vld [vmem:[%s213] sm:$0xff]
        %v260 = vunpack.c.l.bf16 %v259
        %v261 = vunpack.c.h.bf16 %v259
        %262 = vrot.lane.b32.xlu0 %v260, 17
        %v263 = vpop.permute.xlu0 %262
        %264 = vrot.lane.b32.xlu0 %v261, 17
        %v265 = vpop.permute.xlu0 %264
        %v266 = vlaneseq
        %v267 = vand.u32 %v266, 127
        %vm268 = vcmp.lt.s32.totalorder %v267, 17
        %v269 = vsel %vm268, %v263, %v265
        %v270 = vsel %vm268, %v265, %v263
        %v271 = vld [vmem:[#allocation8] sm:$0x3]
        %v273 = vlaneseq
        %v274 = vshrl.u32 %v273, 7
        %v275 = vsub.s32 0, %v274
        %v276 = vrot.slane %v271, %v275
        %v277 = vlaneseq
        %v278 = vshrl.u32 %v277, 7
        %v279 = vsub.s32 1, %v278
        %v280 = vrot.slane %v271, %v279
        %v283 = vmul.f32 %v270, %v276
        %v284 = vmul.f32 %v269, %v280
        %285 = vst [vmem:[#allocation2] sm:$0xff] %v283
        %286 = vst [vmem:[#allocation2 + $0x8] sm:$0xff] %v284
        %287 = vrot.lane.b32.xlu0 %v260, 16
        %v288 = vpop.permute.xlu0 %287
        %289 = vrot.lane.b32.xlu0 %v261, 16
        %v290 = vpop.permute.xlu0 %289
        %vm291 = vcmp.lt.s32.totalorder %v267, 16
        %v292 = vsel %vm291, %v288, %v290
        %v293 = vsel %vm291, %v290, %v288
        %s294 = scalar_lea.vmem [#allocation8], 2
        %v295 = vld [vmem:[%s294] sm:$0x3]
        %v297 = vlaneseq
        %v298 = vshrl.u32 %v297, 7
        %v299 = vsub.s32 0, %v298
        %v300 = vrot.slane %v295, %v299
        %v301 = vlaneseq
        %v302 = vshrl.u32 %v301, 7
        %v303 = vsub.s32 1, %v302
        %v304 = vrot.slane %v295, %v303
        %v307 = vmul.f32 %v293, %v300
        %v308 = vmul.f32 %v292, %v304
        %309 = vst [vmem:[#allocation2 + $0x10] sm:$0xff] %v307
        %310 = vst [vmem:[#allocation2 + $0x18] sm:$0xff] %v308
        %311 = vrot.lane.b32.xlu0 %v260, 15
        %v312 = vpop.permute.xlu0 %311
        %313 = vrot.lane.b32.xlu0 %v261, 15
        %v314 = vpop.permute.xlu0 %313
        %vm315 = vcmp.lt.s32.totalorder %v267, 15
        %v316 = vsel %vm315, %v312, %v314
        %v317 = vsel %vm315, %v314, %v312
        %s318 = scalar_lea.vmem [#allocation8], 4
        %v319 = vld [vmem:[%s318] sm:$0x3]
        %v321 = vlaneseq
        %v322 = vshrl.u32 %v321, 7
        %v323 = vsub.s32 0, %v322
        %v324 = vrot.slane %v319, %v323
        %v325 = vlaneseq
        %v326 = vshrl.u32 %v325, 7
        %v327 = vsub.s32 1, %v326
        %v328 = vrot.slane %v319, %v327
        %v331 = vmul.f32 %v317, %v324
        %v332 = vmul.f32 %v316, %v328
        %333 = vst [vmem:[#allocation2 + $0x20] sm:$0xff] %v331
        %334 = vst [vmem:[#allocation2 + $0x28] sm:$0xff] %v332
        %335 = vrot.lane.b32.xlu0 %v260, 1
        %v336 = vpop.permute.xlu0 %335
        %337 = vrot.lane.b32.xlu0 %v261, 1
        %v338 = vpop.permute.xlu0 %337
        %vm339 = vcmp.lt.s32.totalorder %v267, 1
        %v340 = vsel %vm339, %v336, %v338
        %v341 = vsel %vm339, %v338, %v336
        %s342 = scalar_lea.vmem [#allocation8], 6
        %v343 = vld [vmem:[%s342] sm:$0x3]
        %v345 = vlaneseq
        %v346 = vshrl.u32 %v345, 7
        %v347 = vsub.s32 0, %v346
        %v348 = vrot.slane %v343, %v347
        %v349 = vlaneseq
        %v350 = vshrl.u32 %v349, 7
        %v351 = vsub.s32 1, %v350
        %v352 = vrot.slane %v343, %v351
        %v355 = vmul.f32 %v341, %v348
        %v356 = vmul.f32 %v340, %v352
        %357 = vst [vmem:[#allocation2 + $0x30] sm:$0xff] %v355
        %358 = vst [vmem:[#allocation2 + $0x38] sm:$0xff] %v356
        %s359 = scalar_lea.vmem [#allocation8], 8
        %v360 = vld [vmem:[%s359] sm:$0x3]
        %v362 = vlaneseq
        %v363 = vshrl.u32 %v362, 7
        %v364 = vsub.s32 0, %v363
        %v365 = vrot.slane %v360, %v364
        %v366 = vlaneseq
        %v367 = vshrl.u32 %v366, 7
        %v368 = vsub.s32 1, %v367
        %v369 = vrot.slane %v360, %v368
        %v372 = vmul.f32 %v260, %v365
        %v373 = vmul.f32 %v261, %v369
        %374 = vst [vmem:[#allocation2 + $0x40] sm:$0xff] %v372
        %375 = vst [vmem:[#allocation2 + $0x48] sm:$0xff] %v373
        %376 = vrot.lane.b32.xlu0 %v260, 127
        %v377 = vpop.permute.xlu0 %376
        %378 = vrot.lane.b32.xlu0 %v261, 127
        %v379 = vpop.permute.xlu0 %378
        %vm380 = vcmp.lt.s32.totalorder %v267, 127
        %v381 = vsel %vm380, %v377, %v379
        %v382 = vsel %vm380, %v379, %v377
        %s383 = scalar_lea.vmem [#allocation8], 10
        %v384 = vld [vmem:[%s383] sm:$0x3]
        %v386 = vlaneseq
        %v387 = vshrl.u32 %v386, 7
        %v388 = vsub.s32 0, %v387
        %v389 = vrot.slane %v384, %v388
        %v390 = vlaneseq
        %v391 = vshrl.u32 %v390, 7
        %v392 = vsub.s32 1, %v391
        %v393 = vrot.slane %v384, %v392
        %v396 = vmul.f32 %v381, %v389
        %v397 = vmul.f32 %v382, %v393
        %398 = vst [vmem:[#allocation2 + $0x50] sm:$0xff] %v396
        %399 = vst [vmem:[#allocation2 + $0x58] sm:$0xff] %v397
        %400 = vrot.lane.b32.xlu0 %v260, 113
        %v401 = vpop.permute.xlu0 %400
        %402 = vrot.lane.b32.xlu0 %v261, 113
        %v403 = vpop.permute.xlu0 %402
        %vm404 = vcmp.lt.s32.totalorder %v267, 113
        %v405 = vsel %vm404, %v401, %v403
        %v406 = vsel %vm404, %v403, %v401
        %s407 = scalar_lea.vmem [#allocation8], 12
        %v408 = vld [vmem:[%s407] sm:$0x3]
        %v410 = vlaneseq
        %v411 = vshrl.u32 %v410, 7
        %v412 = vsub.s32 0, %v411
        %v413 = vrot.slane %v408, %v412
        %v414 = vlaneseq
        %v415 = vshrl.u32 %v414, 7
        %v416 = vsub.s32 1, %v415
        %v417 = vrot.slane %v408, %v416
        %v420 = vmul.f32 %v405, %v413
        %v421 = vmul.f32 %v406, %v417
        %422 = vst [vmem:[#allocation2 + $0x60] sm:$0xff] %v420
        %423 = vst [vmem:[#allocation2 + $0x68] sm:$0xff] %v421
        %424 = vrot.lane.b32.xlu0 %v260, 112
        %v425 = vpop.permute.xlu0 %424
        %426 = vrot.lane.b32.xlu0 %v261, 112
        %v427 = vpop.permute.xlu0 %426
        %vm428 = vcmp.lt.s32.totalorder %v267, 112
        %v429 = vsel %vm428, %v425, %v427
        %v430 = vsel %vm428, %v427, %v425
        %s431 = scalar_lea.vmem [#allocation8], 14
        %v432 = vld [vmem:[%s431] sm:$0x3]
        %v434 = vlaneseq
        %v435 = vshrl.u32 %v434, 7
        %v436 = vsub.s32 0, %v435
        %v437 = vrot.slane %v432, %v436
        %v438 = vlaneseq
        %v439 = vshrl.u32 %v438, 7
        %v440 = vsub.s32 1, %v439
        %v441 = vrot.slane %v432, %v440
        %v444 = vmul.f32 %v429, %v437
        %v445 = vmul.f32 %v430, %v441
        %446 = vst [vmem:[#allocation2 + $0x70] sm:$0xff] %v444
        %447 = vst [vmem:[#allocation2 + $0x78] sm:$0xff] %v445
        %448 = vrot.lane.b32.xlu0 %v260, 111
        %v449 = vpop.permute.xlu0 %448
        %450 = vrot.lane.b32.xlu0 %v261, 111
        %v451 = vpop.permute.xlu0 %450
        %vm452 = vcmp.lt.s32.totalorder %v267, 111
        %v453 = vsel %vm452, %v449, %v451
        %v454 = vsel %vm452, %v451, %v449
        %s455 = scalar_lea.vmem [#allocation8], 16
        %v456 = vld [vmem:[%s455] sm:$0x3]
        %v458 = vlaneseq
        %v459 = vshrl.u32 %v458, 7
        %v460 = vsub.s32 0, %v459
        %v461 = vrot.slane %v456, %v460
        %v462 = vlaneseq
        %v463 = vshrl.u32 %v462, 7
        %v464 = vsub.s32 1, %v463
        %v465 = vrot.slane %v456, %v464
        %v468 = vmul.f32 %v453, %v461
        %v469 = vmul.f32 %v454, %v465
        %470 = vst [vmem:[#allocation2 + $0x80] sm:$0xff] %v468
        %471 = vst [vmem:[#allocation2 + $0x88] sm:$0xff] %v469
        %v472 = vld [vmem:[#allocation2] sm:$0xff]
        %v473 = vld [vmem:[#allocation2 + $0x8] sm:$0xff]
        %v474 = vld [vmem:[#allocation2 + $0x10] sm:$0xff]
        %v475 = vld [vmem:[#allocation2 + $0x18] sm:$0xff]
        %v476 = vld [vmem:[#allocation2 + $0x20] sm:$0xff]
        %v477 = vld [vmem:[#allocation2 + $0x28] sm:$0xff]
        %v478 = vld [vmem:[#allocation2 + $0x30] sm:$0xff]
        %v479 = vld [vmem:[#allocation2 + $0x38] sm:$0xff]
        %v480 = vld [vmem:[#allocation2 + $0x40] sm:$0xff]
        %v481 = vld [vmem:[#allocation2 + $0x48] sm:$0xff]
        %v482 = vld [vmem:[#allocation2 + $0x50] sm:$0xff]
        %v483 = vld [vmem:[#allocation2 + $0x58] sm:$0xff]
        %v484 = vld [vmem:[#allocation2 + $0x60] sm:$0xff]
        %v485 = vld [vmem:[#allocation2 + $0x68] sm:$0xff]
        %v486 = vld [vmem:[#allocation2 + $0x70] sm:$0xff]
        %v487 = vld [vmem:[#allocation2 + $0x78] sm:$0xff]
        %v488 = vld [vmem:[#allocation2 + $0x80] sm:$0xff]
        %v489 = vld [vmem:[#allocation2 + $0x88] sm:$0xff]
        %v490 = vpack.c.bf16 %v474, %v472
        %v491 = vpack.c.bf16 %v475, %v473
        %v492 = vpack.c.bf16 %v478, %v476
        %v493 = vpack.c.bf16 %v479, %v477
        %v494 = vpack.c.bf16 %v482, %v480
        %v495 = vpack.c.bf16 %v483, %v481
        %v496 = vpack.c.bf16 %v486, %v484
        %v497 = vpack.c.bf16 %v487, %v485
        %v498 = vpack.c.bf16 %v488, %v488
        %v499 = vpack.c.bf16 %v489, %v489
        %v500 = vld [vmem:[#allocation6] sm:$0xf]
        %v501 = vld [vmem:[#allocation6 + $0x4] sm:$0xf]
        %v504 = vunpack.c.l.b16 %v500
        %v505 = vunpack.c.l.b16 %v501
        %v506 = vpack.c.b16 %v505, %v504
        %vm507 = vcmask 588800
        %v509 = vsel %vm507, %v506, 0
        %vm511 = vcmask 1043456
        %v513 = vsel %vm511, %v498, 0
        %v516 = vsel %vm511, %v499, 0
        %518 = vmatprep.subr.bf16.mxu0 %v491
        %519 = vmatpush1.bf16.msra.mxu0 %v490
        %520 = vmatprep.subr.bf16.mxu0 %v493
        %521 = vmatpush1.bf16.msra.mxu0 %v492
        %522 = vmatprep.subr.bf16.mxu0 %v495
        %523 = vmatpush1.bf16.msra.mxu0 %v494
        %524 = vmatprep.subr.bf16.mxu0 %v497
        %525 = vmatpush1.bf16.msra.mxu0 %v496
        %526 = vmatprep.subr.bf16.mxu0 %v516
        %527 = vmatpush1.bf16.msra.mxu0 %v513
        %528 = vmatprep.subr.bf16.mxu0 0
        %529 = vmatpush1.bf16.msra.mxu0 0
        %530 = vmatprep.subr.bf16.mxu0 0
        %531 = vmatpush1.bf16.msra.mxu0 0
        %532 = vmatprep.subr.bf16.mxu0 0
        %533 = vmatpush1.bf16.msra.mxu0 0
        %534 = vmatprep.subr.bf16.mxu0 0
        %535 = vmatpush1.bf16.msra.mxu0 0
        %536 = vmatprep.subr.bf16.mxu0 0
        %537 = vmatpush1.bf16.msra.mxu0 0
        %538 = vmatprep.subr.bf16.mxu0 0
        %539 = vmatpush1.bf16.msra.mxu0 0
        %540 = vmatprep.subr.bf16.mxu0 0
        %541 = vmatpush1.bf16.msra.mxu0 0
        %542 = vmatprep.subr.bf16.mxu0 0
        %543 = vmatpush1.bf16.msra.mxu0 0
        %544 = vmatprep.subr.bf16.mxu0 0
        %545 = vmatpush1.bf16.msra.mxu0 0
        %546 = vmatprep.subr.bf16.mxu0 0
        %547 = vmatpush1.bf16.msra.mxu0 0
        %548 = vmatprep.subr.bf16.mxu0 0
        %549 = vmatpush1.bf16.msra.mxu0 0
        %550 = vmatprep.mubr.bf16.mxu0 0
        %551 = vmatmul.mubr.bf16.gmra.mrb[0].mxu0 %v509
        %v552 = vpop.f32.mrb[0].mxu0
        %v553 = vadd.f32 0.0, %v552
        %v554 = vpop.f32.mrb[0].mxu0
        %v555 = vadd.f32 0.0, %v554
        %v556 = vpop.f32.mrb[0].mxu0
        %v557 = vadd.f32 0.0, %v556
        %v558 = vpop.f32.mrb[0].mxu0
        %v559 = vadd.f32 0.0, %v558
        %560 = vdwg.mxu0
        %v561 = vpack.c.bf16 %v557, %v553
        %v562 = vpack.c.bf16 %v559, %v555
        %v565 = vunpack.c.l.b16 %v561
        %v566 = vunpack.c.l.b16 %v562
        %v567 = vunpack.c.h.b16 %v561
        %v568 = vunpack.c.h.b16 %v562
        %v569 = vpack.c.b16 %v566, %v565
        %v570 = vpack.c.b16 %v568, %v567
        %573 = vst [vmem:[%s243] sm:$0xff] %v569
        %574 = vst [vmem:[%s243 + $0x8] sm:$0xff] %v570
        %v575 = vadd.f32 %v553, %v555
        %576 = vadd.xlane.f32.xlu0 %v575
        %v577 = vpop.xlane.xlu0 %576
        %v578 = vadd.f32 %v557, %v559
        %579 = vadd.xlane.f32.xlu0 %v578
        %v580 = vpop.xlane.xlu0 %579
        %v581 = vmul.f32 %v553, %v553
        %v582 = vmul.f32 %v555, %v555
        %v583 = vmul.f32 %v557, %v557
        %v584 = vmul.f32 %v559, %v559
        %v585 = vadd.f32 %v581, %v582
        %586 = vadd.xlane.f32.xlu0 %v585
        %v587 = vpop.xlane.xlu0 %586
        %v588 = vadd.f32 %v583, %v584
        %589 = vadd.xlane.f32.xlu0 %v588
        %v590 = vpop.xlane.xlu0 %589
        %vm591 = vcmask 7168
        %v592 = vsel %vm591, %v577, %v587
        %v593 = vsel %vm591, %v580, %v590
        %vm594 = vcmask 15360
        %595 = vst.msk [vmem:[%s257] sm:$0xff] %vm594, %v592
        %596 = vst.msk [vmem:[%s257 + $0x8] sm:$0xff] %vm594, %v593
        %s597 = sand.u32 %s99, 1
        %s598 = scalar_lea.sflag [#allocation5], %s597
        %s599 = sand.u32 %s99, 1
        %s600 = smul.addr %s599, 16
        %s601 = scalar_lea.vmem [#allocation9], %s600
        %p602 = scmp.lt.s32.totalorder %s23, 1
        %s603 = scalar_select %p602, %s23, 1
        %s604 = smul.addr %s603, 2
        %s605 = smul.addr %s604, 8
        %s606 = scalar_lea.vmem %s4, %s605
        // Predicated region
        $region45: #{tpu_custom_call.1} parent=31 // pred_check
          %p607 = pneg %p109
        $region46: #{tpu_custom_call.1} parent=31 // pred_check_branch
          %609 = sbr.rel (%p607) target = $region48
        $region47: #{tpu_custom_call.1} parent=31 // pred_region
          %s610 = smul.u32 2, %s23
          %s612 = ssub.s32 256, 256
          %613 = vsyncadd %s598, %s612
          %s614 = smul.addr %s610, 64
          %s615 = scalar_lea.hbm %s3, %s614
          %s616 = sshll.u32 %s601, 4
          %s617 = int_to_ptr.vmem [resolvable:$true] %s616
          %622 = dma.vmem_to_hbm [thread:$0]  %s617, 256, %s615, %s598, 128, 256, 8
        $region48: #{tpu_custom_call.1} parent=31 // pred_fallthru
          _
        // Predicated region
        $region49: #{tpu_custom_call.1} parent=31 // pred_check
          %p623 = pneg %p135
        $region50: #{tpu_custom_call.1} parent=31 // pred_check_branch
          %625 = sbr.rel (%p623) target = $region52
        $region51: #{tpu_custom_call.1} parent=31 // pred_region
          _
        $region52: #{tpu_custom_call.1} parent=31 // pred_fallthru
          _
      $region32: #{tpu_custom_call.1} parent=5 // pred_fallthru
        _
      %p626 = scmp.le.s32.totalorder 2, %s18
      // Predicated region
      $region53: #{tpu_custom_call.1} parent=5 // pred_check
        %p627 = pneg %p626
      $region54: #{tpu_custom_call.1} parent=5 // pred_check_branch
        %629 = sbr.rel (%p627) target = $region56
      $region55: #{tpu_custom_call.1} parent=5 // pred_region
        %s630 = ssub.s32 %s18, 2
        // Predicated region
        $region57: #{tpu_custom_call.1} parent=55 // pred_check
          %p631 = pneg %p115
        $region58: #{tpu_custom_call.1} parent=55 // pred_check_branch
          %633 = sbr.rel (%p631) target = $region60
        $region59: #{tpu_custom_call.1} parent=55 // pred_region
          %s634 = sand.u32 %s100, 1
          %s635 = scalar_lea.sflag [#allocation5], %s634
          %s636 = sand.u32 %s100, 1
          %s637 = smul.addr %s636, 16
          %s638 = scalar_lea.vmem [#allocation9], %s637
          %639 = dma.done %s635, 256
        $region60: #{tpu_custom_call.1} parent=55 // pred_fallthru
          _
        // Predicated region
        $region61: #{tpu_custom_call.1} parent=55 // pred_check
          %p640 = pneg %p141
        $region62: #{tpu_custom_call.1} parent=55 // pred_check_branch
          %642 = sbr.rel (%p640) target = $region64
        $region63: #{tpu_custom_call.1} parent=55 // pred_region
          %p643 = scmp.lt.s32.totalorder %s24, 1
          %s644 = scalar_select %p643, %s24, 1
          %s645 = smul.addr %s644, 2
          %s646 = smul.addr %s645, 8
          %s647 = scalar_lea.vmem %s4, %s646
        $region64: #{tpu_custom_call.1} parent=55 // pred_fallthru
          _
      $region56: #{tpu_custom_call.1} parent=5 // pred_fallthru
        _
    $region6: #{tpu_custom_call.1} parent=1 // loop_footer
      %s22 = sadd.s32 1, %s18
    $region7: #{tpu_custom_call.1} parent=1 // loop_footer_branch
      %17 = sbr.rel target = $region3
    $region8: #{tpu_custom_call.1} parent=1 // loop_exit
      _
    %648 = vsyncpa [#allocation4], 1
    %s649 = scalar_lea.sflag [#allocation4], 1
    %650 = vsyncpa %s649, 1
    %651 = vsyncpa [#allocation7], 1
    %652 = vsyncpa [#allocation5], 1
    %s653 = scalar_lea.sflag [#allocation5], 1
    %654 = vsyncpa %s653, 1

</llo_original>
